<compile_context>
chip_gen: v7x
topology: tpu7x:2x2x1
jax: 0.10.0
libtpu: 0.0.40
codegen_flags: <defaults>
</compile_context>

<pallas_src>
import jax
import jax.numpy as jnp
from jax.experimental import pallas as pl
from jax.experimental.pallas import tpu as pltpu


def _round_up(x: int, m: int) -> int:
    return ((x + m - 1) // m) * m


def forward_dynamics_kernel(lat_ref, act_ref, w1l_ref, w1a_ref, b1_ref,
                            w2_ref, b2_ref, out_ref):
    """One batch tile of: out = relu([lat, act] @ W1 + b1) @ W2 + b2."""
    # Layer 1: split-concat matmul (two MXU dots, f32 accumulation).
    h = jnp.dot(lat_ref[...], w1l_ref[...], preferred_element_type=jnp.float32)
    h = h + jnp.dot(act_ref[...], w1a_ref[...], preferred_element_type=jnp.float32)
    h = jnp.maximum(h + b1_ref[...], 0.0)                    # bias + ReLU, f32 (VPU)
    # Layer 2: cast h to the weight dtype (no-op for f32, bf16 for the native
    # MXU path); output written directly at the logical (tb, Dout) width.
    out = jnp.dot(h.astype(w2_ref.dtype), w2_ref[...],
                  preferred_element_type=jnp.float32) + b2_ref[...]
    out_ref[...] = out.astype(out_ref.dtype)


def forward_dynamics_forward(latent, action, w1, b1, w2, b2, *,
                             tb=None, use_bf16=False, min_pallas_batch=256):
    """latent: (B, L), action: (B, A); w1: (L+A, H), b1: (H,), w2: (H, L), b2: (L,).
    Returns (B, L) float32, same semantics as the PyTorch module."""
    B, L = latent.shape
    _, A = action.shape
    Din = L + A
    H = w1.shape[1]
    Dout = w2.shape[1]
    assert w1.shape == (Din, H) and w2.shape == (H, Dout)
    out_dtype = latent.dtype

    # Split W1 so the concatenated input is never materialized.
    w1_lat = w1[:L]                                   # (L, H)
    w1_act = w1[L:]                                   # (A, H)
    b1_r = b1.reshape(1, H).astype(jnp.float32)
    b2_r = b2.reshape(1, Dout).astype(jnp.float32)

    # Small-batch fast path: launch overhead dominates; XLA fuses this fine.
    if B < min_pallas_batch:
        h = jnp.maximum(latent @ w1_lat + action @ w1_act + b1_r, 0.0)
        return (h @ w2 + b2_r).astype(out_dtype)

    # bf16 matmul operands (v6e/v7x native MXU path, half the input HBM bytes);
    # biases, accumulation, bias-add/ReLU and the output stay f32.
    if use_bf16:
        latent = latent.astype(jnp.bfloat16)
        action = action.astype(jnp.bfloat16)
        w1_lat = w1_lat.astype(jnp.bfloat16)
        w1_act = w1_act.astype(jnp.bfloat16)
        w2_m = w2.astype(jnp.bfloat16)
    else:
        w2_m = w2

    # Batch tile: multiple of 8 sublanes, big enough to amortize per-step
    # overhead, and (for large B) split so the "parallel" axis has >= 2 grid
    # steps (v7x megacore).  No batch padding: cdiv grid + ragged last tile.
    if tb is None:
        if B >= 512:
            tb = min(4096, _round_up(pl.cdiv(B, 2), 8))
        else:
            tb = min(4096, _round_up(B, 8))
    grid = (pl.cdiv(B, tb),)

    # Advisory cost estimate (2 dots layer 1, 1 dot layer 2).
    flops = 2 * B * (L * H + A * H + H * Dout)
    bytes_accessed = (latent.dtype.itemsize * B * L
                      + action.dtype.itemsize * B * A
                      + w1_lat.dtype.itemsize * (L * H + A * H)
                      + w2_m.dtype.itemsize * H * Dout
                      + 4 * (H + Dout)
                      + out_dtype.itemsize * B * Dout)
    cost = pl.CostEstimate(flops=flops, transcendentals=0,
                           bytes_accessed=bytes_accessed)

    def _specs(weight_mode):
        kw = {} if weight_mode is None else dict(pipeline_mode=weight_mode)
        return [
            pl.BlockSpec((tb, L), lambda i: (i, 0)),            # latent tile
            pl.BlockSpec((tb, A), lambda i: (i, 0)),            # action tile
            pl.BlockSpec((L, H), lambda i: (0, 0), **kw),       # W1 (latent rows)
            pl.BlockSpec((A, H), lambda i: (0, 0), **kw),       # W1 (action rows)
            pl.BlockSpec((1, H), lambda i: (0, 0), **kw),       # b1
            pl.BlockSpec((H, Dout), lambda i: (0, 0), **kw),    # W2 (unpadded)
            pl.BlockSpec((1, Dout), lambda i: (0, 0), **kw),    # b2 (unpadded)
        ]

    def _call(weight_mode):
        return pl.pallas_call(
            forward_dynamics_kernel,
            out_shape=jax.ShapeDtypeStruct((B, Dout), out_dtype),
            grid=grid,
            in_specs=_specs(weight_mode),
            out_specs=pl.BlockSpec((tb, Dout), lambda i: (i, 0)),
            compiler_params=pltpu.CompilerParams(
                dimension_semantics=("parallel",)),              # v7x 2-TC sharding
            cost_estimate=cost,
        )(latent, action, w1_lat, w1_act, b1_r, w2_m, b2_r)

    try:
        # Constant-index_map operands never re-DMA; single-buffer them.
        return _call(pl.Buffered(1))
    except Exception:
        # Fallback if this Pallas version rejects buffer_count=1 (same result,
        # default double buffering for the resident constants).
        return _call(None)


def init_params(key, latent_dim, action_dim, hidden_dim=64):
    """Deterministic init matching the nn.Module's parameter shapes
    (Linear weights stored transposed: (in_features, out_features))."""
    k1, k2, k3, k4 = jax.random.split(key, 4)
    din = latent_dim + action_dim
    lim1 = 1.0 / jnp.sqrt(din)
    w1 = jax.random.uniform(k1, (din, hidden_dim), jnp.float32, -lim1, lim1)
    b1 = jax.random.uniform(k2, (hidden_dim,), jnp.float32, -lim1, lim1)
    lim2 = 1.0 / jnp.sqrt(hidden_dim)
    w2 = jax.random.uniform(k3, (hidden_dim, latent_dim), jnp.float32, -lim2, lim2)
    b2 = jax.random.uniform(k4, (latent_dim,), jnp.float32, -lim2, lim2)
    return w1, b1, w2, b2


def _reference(latent, action, w1, b1, w2, b2):
    x = jnp.concatenate([latent, action], axis=-1)
    h = jnp.maximum(x @ w1 + b1, 0.0)
    return h @ w2 + b2


if __name__ == "__main__":
    batch, latent_dim, action_dim, hidden_dim = 8, 16, 8, 64

    key = jax.random.PRNGKey(0)
    pkey, lkey, akey = jax.random.split(key, 3)
    w1, b1, w2, b2 = init_params(pkey, latent_dim, action_dim, hidden_dim)
    latent = jax.random.normal(lkey, (batch, latent_dim), jnp.float32)
    action = jax.random.normal(akey, (batch, action_dim), jnp.float32)
    ref = _reference(latent, action, w1, b1, w2, b2)

    # 1) f32 Pallas path (force past the small-batch fast path), tight check.
    out = forward_dynamics_forward(latent, action, w1, b1, w2, b2,
                                   min_pallas_batch=0)
    jax.block_until_ready(out)
    assert out.shape == (batch, latent_dim)
    assert jnp.allclose(out, ref, atol=1e-5, rtol=1e-5)

    # 2) Ragged batch (B=5 not a multiple of the 8-row tile) -- no padding pass.
    latent2, action2 = latent[:5], action[:5]
    out2 = forward_dynamics_forward(latent2, action2, w1, b1, w2, b2,
                                    min_pallas_batch=0)
    jax.block_until_ready(out2)
    assert out2.shape == (5, latent_dim)
    assert jnp.allclose(out2, _reference(latent2, action2, w1, b1, w2, b2),
                        atol=1e-5, rtol=1e-5)

    # 3) bf16-operand path (v6e/v7x fast path), looser tolerance.
    out3 = forward_dynamics_forward(latent, action, w1, b1, w2, b2,
                                    min_pallas_batch=0, use_bf16=True)
    jax.block_until_ready(out3)
    assert jnp.allclose(out3, ref, atol=5e-2, rtol=5e-2)

    # 4) Default small-batch fast path (no pallas_call at B=8).
    out4 = forward_dynamics_forward(latent, action, w1, b1, w2, b2)
    jax.block_until_ready(out4)
    assert jnp.allclose(out4, ref, atol=1e-5, rtol=1e-5)

    print("KERNEL_OK")
</pallas_src>

<mosaic_0001>
module attributes {stable_mosaic.version = 11 : i64} {
  func.func @forward_dynamics_kernel(%arg0: i32, %arg1: memref<8x16xf32, #tpu.memory_space<vmem>>, %arg2: memref<8x8xf32, #tpu.memory_space<vmem>>, %arg3: memref<16x64xf32, #tpu.memory_space<vmem>>, %arg4: memref<8x64xf32, #tpu.memory_space<vmem>>, %arg5: memref<1x64xf32, #tpu.memory_space<vmem>>, %arg6: memref<64x16xf32, #tpu.memory_space<vmem>>, %arg7: memref<1x16xf32, #tpu.memory_space<vmem>>, %arg8: memref<8x16xf32, #tpu.memory_space<vmem>>) attributes {dimension_semantics = [#tpu.dimension_semantics<parallel>], iteration_bounds = array<i64: 1>, scalar_prefetch = 0 : i64, scratch_operands = 0 : i64, tpu.core_type = #tpu.core_type<tc>, window_params = [{transform_indices = @transform_0, window_bounds = array<i64: 8, 16>}, {transform_indices = @transform_1, window_bounds = array<i64: 8, 8>}, {pipeline_mode = #tpu.pipeline_mode<synchronous>, transform_indices = @transform_2, window_bounds = array<i64: 16, 64>}, {pipeline_mode = #tpu.pipeline_mode<synchronous>, transform_indices = @transform_3, window_bounds = array<i64: 8, 64>}, {pipeline_mode = #tpu.pipeline_mode<synchronous>, transform_indices = @transform_4, window_bounds = array<i64: 1, 64>}, {pipeline_mode = #tpu.pipeline_mode<synchronous>, transform_indices = @transform_5, window_bounds = array<i64: 64, 16>}, {pipeline_mode = #tpu.pipeline_mode<synchronous>, transform_indices = @transform_6, window_bounds = array<i64: 1, 16>}, {transform_indices = @transform_7, window_bounds = array<i64: 8, 16>}]} {
    %c0 = arith.constant 0 : index
    %c0_0 = arith.constant 0 : index
    %0 = vector.load %arg1[%c0, %c0_0] : memref<8x16xf32, #tpu.memory_space<vmem>>, vector<8x16xf32>
    %c0_1 = arith.constant 0 : index
    %c0_2 = arith.constant 0 : index
    %1 = vector.load %arg3[%c0_1, %c0_2] : memref<16x64xf32, #tpu.memory_space<vmem>>, vector<16x64xf32>
    %cst = arith.constant dense<0.000000e+00> : vector<8x64xf32>
    %2 = tpu.matmul %0, %1, %cst {dimension_numbers = #tpu.dot_dimension_numbers<[1], [0], [0], [1], [0, 0, 1, 1], [], []>} : vector<8x16xf32>, vector<16x64xf32>, vector<8x64xf32> -> vector<8x64xf32>
    %c0_3 = arith.constant 0 : index
    %c0_4 = arith.constant 0 : index
    %3 = vector.load %arg2[%c0_3, %c0_4] : memref<8x8xf32, #tpu.memory_space<vmem>>, vector<8x8xf32>
    %c0_5 = arith.constant 0 : index
    %c0_6 = arith.constant 0 : index
    %4 = vector.load %arg4[%c0_5, %c0_6] : memref<8x64xf32, #tpu.memory_space<vmem>>, vector<8x64xf32>
    %cst_7 = arith.constant dense<0.000000e+00> : vector<8x64xf32>
    %5 = tpu.matmul %3, %4, %cst_7 {dimension_numbers = #tpu.dot_dimension_numbers<[1], [0], [0], [1], [0, 0, 1, 1], [], []>} : vector<8x8xf32>, vector<8x64xf32>, vector<8x64xf32> -> vector<8x64xf32>
    %6 = arith.addf %2, %5 : vector<8x64xf32>
    %c0_8 = arith.constant 0 : index
    %c0_9 = arith.constant 0 : index
    %7 = vector.load %arg5[%c0_8, %c0_9] : memref<1x64xf32, #tpu.memory_space<vmem>>, vector<1x64xf32>
    %8 = vector.broadcast %7 : vector<1x64xf32> to vector<8x64xf32>
    %9 = arith.addf %6, %8 : vector<8x64xf32>
    %cst_10 = arith.constant 0.000000e+00 : f32
    %10 = vector.broadcast %cst_10 : f32 to vector<8x64xf32>
    %11 = arith.maximumf %9, %10 : vector<8x64xf32>
    %c0_11 = arith.constant 0 : index
    %c0_12 = arith.constant 0 : index
    %12 = vector.load %arg6[%c0_11, %c0_12] : memref<64x16xf32, #tpu.memory_space<vmem>>, vector<64x16xf32>
    %cst_13 = arith.constant dense<0.000000e+00> : vector<8x16xf32>
    %13 = tpu.matmul %11, %12, %cst_13 {dimension_numbers = #tpu.dot_dimension_numbers<[1], [0], [0], [1], [0, 0, 1, 1], [], []>} : vector<8x64xf32>, vector<64x16xf32>, vector<8x16xf32> -> vector<8x16xf32>
    %c0_14 = arith.constant 0 : index
    %c0_15 = arith.constant 0 : index
    %14 = vector.load %arg7[%c0_14, %c0_15] : memref<1x16xf32, #tpu.memory_space<vmem>>, vector<1x16xf32>
    %15 = vector.broadcast %14 : vector<1x16xf32> to vector<8x16xf32>
    %16 = arith.addf %13, %15 : vector<8x16xf32>
    %c0_16 = arith.constant 0 : index
    %c0_17 = arith.constant 0 : index
    %17 = vector.load %arg8[%c0_16, %c0_17] : memref<8x16xf32, #tpu.memory_space<vmem>>, vector<8x16xf32>
    tpu.vector_store %arg8[%c0_16, %c0_17], %16 {strides = array<i32>} : memref<8x16xf32, #tpu.memory_space<vmem>>, vector<8x16xf32>,
    return
  }
  func.func @transform_0(%arg0: i32) -> (i32, i32) {
    %c0_i32 = arith.constant 0 : i32
    %c0_i32_0 = arith.constant 0 : i32
    return %arg0, %c0_i32 : i32, i32
  }
  func.func @transform_1(%arg0: i32) -> (i32, i32) {
    %c0_i32 = arith.constant 0 : i32
    %c0_i32_0 = arith.constant 0 : i32
    return %arg0, %c0_i32 : i32, i32
  }
  func.func @transform_2(%arg0: i32) -> (i32, i32) {
    %c0_i32 = arith.constant 0 : i32
    %c0_i32_0 = arith.constant 0 : i32
    %c0_i32_1 = arith.constant 0 : i32
    return %c0_i32, %c0_i32_0 : i32, i32
  }
  func.func @transform_3(%arg0: i32) -> (i32, i32) {
    %c0_i32 = arith.constant 0 : i32
    %c0_i32_0 = arith.constant 0 : i32
    %c0_i32_1 = arith.constant 0 : i32
    return %c0_i32, %c0_i32_0 : i32, i32
  }
  func.func @transform_4(%arg0: i32) -> (i32, i32) {
    %c0_i32 = arith.constant 0 : i32
    %c0_i32_0 = arith.constant 0 : i32
    %c0_i32_1 = arith.constant 0 : i32
    return %c0_i32, %c0_i32_0 : i32, i32
  }
  func.func @transform_5(%arg0: i32) -> (i32, i32) {
    %c0_i32 = arith.constant 0 : i32
    %c0_i32_0 = arith.constant 0 : i32
    %c0_i32_1 = arith.constant 0 : i32
    return %c0_i32, %c0_i32_0 : i32, i32
  }
  func.func @transform_6(%arg0: i32) -> (i32, i32) {
    %c0_i32 = arith.constant 0 : i32
    %c0_i32_0 = arith.constant 0 : i32
    %c0_i32_1 = arith.constant 0 : i32
    return %c0_i32, %c0_i32_0 : i32, i32
  }
  func.func @transform_7(%arg0: i32) -> (i32, i32) {
    %c0_i32 = arith.constant 0 : i32
    %c0_i32_0 = arith.constant 0 : i32
    return %arg0, %c0_i32 : i32, i32
  }
}

module attributes {stable_mosaic.version = 11 : i64} {
  func.func @forward_dynamics_kernel(%arg0: i32, %arg1: memref<8x16xf32, #tpu.memory_space<vmem>>, %arg2: memref<8x8xf32, #tpu.memory_space<vmem>>, %arg3: memref<16x64xf32, #tpu.memory_space<vmem>>, %arg4: memref<8x64xf32, #tpu.memory_space<vmem>>, %arg5: memref<1x64xf32, #tpu.memory_space<vmem>>, %arg6: memref<64x16xf32, #tpu.memory_space<vmem>>, %arg7: memref<1x16xf32, #tpu.memory_space<vmem>>, %arg8: memref<8x16xf32, #tpu.memory_space<vmem>>) attributes {dimension_semantics = [#tpu.dimension_semantics<parallel>], iteration_bounds = array<i64: 1>, scalar_prefetch = 0 : i64, scratch_operands = 0 : i64, tpu.core_type = #tpu.core_type<tc>, window_params = [{transform_indices = @transform_0, window_bounds = array<i64: 8, 16>}, {transform_indices = @transform_1, window_bounds = array<i64: 8, 8>}, {pipeline_mode = #tpu.pipeline_mode<synchronous>, transform_indices = @transform_2, window_bounds = array<i64: 16, 64>}, {pipeline_mode = #tpu.pipeline_mode<synchronous>, transform_indices = @transform_3, window_bounds = array<i64: 8, 64>}, {pipeline_mode = #tpu.pipeline_mode<synchronous>, transform_indices = @transform_4, window_bounds = array<i64: 1, 64>}, {pipeline_mode = #tpu.pipeline_mode<synchronous>, transform_indices = @transform_5, window_bounds = array<i64: 64, 16>}, {pipeline_mode = #tpu.pipeline_mode<synchronous>, transform_indices = @transform_6, window_bounds = array<i64: 1, 16>}, {transform_indices = @transform_7, window_bounds = array<i64: 8, 16>}]} {
    %c0 = arith.constant 0 : index
    %c0_0 = arith.constant 0 : index
    %0 = vector.load %arg1[%c0, %c0_0] : memref<8x16xf32, #tpu.memory_space<vmem>>, vector<8x16xf32>
    %c0_1 = arith.constant 0 : index
    %c0_2 = arith.constant 0 : index
    %1 = vector.load %arg3[%c0_1, %c0_2] : memref<16x64xf32, #tpu.memory_space<vmem>>, vector<16x64xf32>
    %cst = arith.constant dense<0.000000e+00> : vector<8x64xf32>
    %2 = tpu.matmul %0, %1, %cst {dimension_numbers = #tpu.dot_dimension_numbers<[1], [0], [0], [1], [0, 0, 1, 1], [], []>} : vector<8x16xf32>, vector<16x64xf32>, vector<8x64xf32> -> vector<8x64xf32>
    %c0_3 = arith.constant 0 : index
    %c0_4 = arith.constant 0 : index
    %3 = vector.load %arg2[%c0_3, %c0_4] : memref<8x8xf32, #tpu.memory_space<vmem>>, vector<8x8xf32>
    %c0_5 = arith.constant 0 : index
    %c0_6 = arith.constant 0 : index
    %4 = vector.load %arg4[%c0_5, %c0_6] : memref<8x64xf32, #tpu.memory_space<vmem>>, vector<8x64xf32>
    %cst_7 = arith.constant dense<0.000000e+00> : vector<8x64xf32>
    %5 = tpu.matmul %3, %4, %cst_7 {dimension_numbers = #tpu.dot_dimension_numbers<[1], [0], [0], [1], [0, 0, 1, 1], [], []>} : vector<8x8xf32>, vector<8x64xf32>, vector<8x64xf32> -> vector<8x64xf32>
    %6 = arith.addf %2, %5 : vector<8x64xf32>
    %c0_8 = arith.constant 0 : index
    %c0_9 = arith.constant 0 : index
    %7 = vector.load %arg5[%c0_8, %c0_9] : memref<1x64xf32, #tpu.memory_space<vmem>>, vector<1x64xf32>
    %8 = vector.broadcast %7 : vector<1x64xf32> to vector<8x64xf32>
    %9 = arith.addf %6, %8 : vector<8x64xf32>
    %cst_10 = arith.constant 0.000000e+00 : f32
    %10 = vector.broadcast %cst_10 : f32 to vector<8x64xf32>
    %11 = arith.maximumf %9, %10 : vector<8x64xf32>
    %c0_11 = arith.constant 0 : index
    %c0_12 = arith.constant 0 : index
    %12 = vector.load %arg6[%c0_11, %c0_12] : memref<64x16xf32, #tpu.memory_space<vmem>>, vector<64x16xf32>
    %cst_13 = arith.constant dense<0.000000e+00> : vector<8x16xf32>
    %13 = tpu.matmul %11, %12, %cst_13 {dimension_numbers = #tpu.dot_dimension_numbers<[1], [0], [0], [1], [0, 0, 1, 1], [], []>} : vector<8x64xf32>, vector<64x16xf32>, vector<8x16xf32> -> vector<8x16xf32>
    %c0_14 = arith.constant 0 : index
    %c0_15 = arith.constant 0 : index
    %14 = vector.load %arg7[%c0_14, %c0_15] : memref<1x16xf32, #tpu.memory_space<vmem>>, vector<1x16xf32>
    %15 = vector.broadcast %14 : vector<1x16xf32> to vector<8x16xf32>
    %16 = arith.addf %13, %15 : vector<8x16xf32>
    %c0_16 = arith.constant 0 : index
    %c0_17 = arith.constant 0 : index
    %17 = vector.load %arg8[%c0_16, %c0_17] : memref<8x16xf32, #tpu.memory_space<vmem>>, vector<8x16xf32>
    tpu.vector_store %arg8[%c0_16, %c0_17], %16 {strides = array<i32>} : memref<8x16xf32, #tpu.memory_space<vmem>>, vector<8x16xf32>,
    return
  }
  func.func @transform_0(%arg0: i32) -> (i32, i32) {
    %c0_i32 = arith.constant 0 : i32
    %c0_i32_0 = arith.constant 0 : i32
    return %arg0, %c0_i32 : i32, i32
  }
  func.func @transform_1(%arg0: i32) -> (i32, i32) {
    %c0_i32 = arith.constant 0 : i32
    %c0_i32_0 = arith.constant 0 : i32
    return %arg0, %c0_i32 : i32, i32
  }
  func.func @transform_2(%arg0: i32) -> (i32, i32) {
    %c0_i32 = arith.constant 0 : i32
    %c0_i32_0 = arith.constant 0 : i32
    %c0_i32_1 = arith.constant 0 : i32
    return %c0_i32, %c0_i32_0 : i32, i32
  }
  func.func @transform_3(%arg0: i32) -> (i32, i32) {
    %c0_i32 = arith.constant 0 : i32
    %c0_i32_0 = arith.constant 0 : i32
    %c0_i32_1 = arith.constant 0 : i32
    return %c0_i32, %c0_i32_0 : i32, i32
  }
  func.func @transform_4(%arg0: i32) -> (i32, i32) {
    %c0_i32 = arith.constant 0 : i32
    %c0_i32_0 = arith.constant 0 : i32
    %c0_i32_1 = arith.constant 0 : i32
    return %c0_i32, %c0_i32_0 : i32, i32
  }
  func.func @transform_5(%arg0: i32) -> (i32, i32) {
    %c0_i32 = arith.constant 0 : i32
    %c0_i32_0 = arith.constant 0 : i32
    %c0_i32_1 = arith.constant 0 : i32
    return %c0_i32, %c0_i32_0 : i32, i32
  }
  func.func @transform_6(%arg0: i32) -> (i32, i32) {
    %c0_i32 = arith.constant 0 : i32
    %c0_i32_0 = arith.constant 0 : i32
    %c0_i32_1 = arith.constant 0 : i32
    return %c0_i32, %c0_i32_0 : i32, i32
  }
  func.func @transform_7(%arg0: i32) -> (i32, i32) {
    %c0_i32 = arith.constant 0 : i32
    %c0_i32_0 = arith.constant 0 : i32
    return %arg0, %c0_i32 : i32, i32
  }
}

</mosaic_0001>

<llo_original>
// kernel: tpu_custom_call.1
$region0: #{tpu_custom_call.1}
  #allocation0 [shape = 'u32[]', space=smem, size = 0x4, offset = 0x4, fixed_abs, tag = 'smem constant byte address 0x4 - core index']
  #allocation1 [shape = 'u32[144,128]{1,0:T(1,128)}', space=vmem, size = 0x12000, scoped, tag = 'internal scratch']
  %s0 = inlined_call_operand.vmem [shape: f32[8,16], index: 0, kind: input, shape index: {}]
  %s1 = inlined_call_operand.vmem [shape: f32[8,8], index: 1, kind: input, shape index: {}]
  %s2 = inlined_call_operand.vmem [shape: f32[16,64], index: 2, kind: input, shape index: {}]
  %s3 = inlined_call_operand.vmem [shape: f32[8,64], index: 3, kind: input, shape index: {}]
  %s4 = inlined_call_operand.vmem [shape: f32[1,64], index: 4, kind: input, shape index: {}]
  %s5 = inlined_call_operand.vmem [shape: f32[64,16], index: 5, kind: input, shape index: {}]
  %s6 = inlined_call_operand.vmem [shape: f32[1,16], index: 6, kind: input, shape index: {}]
  %s7 = inlined_call_operand.hbm [shape: f32[8,16], index: 7, kind: output, shape index: {}]
  %s8 = sld [smem:[#allocation0]]
  $region38: #{tpu_custom_call.1} parent=0
    _
  %s10 = ssub.s32 1, %s8
  %s11 = scalar_select 0, %s10, %s8
  $region1: #{tpu_custom_call.1} parent=0
    #allocation2 [shape = 'u8[4096]{0}', space=vmem, size = 0x1000, scoped, tag = 'output window, operand 0, single buffered']
    #allocation3 [shape = 's32[1]{0}', space=sflag, size = 0x4, scoped, tag = 'scoped memory for tpu_custom_call.1']
    %12 = vsyncpa [#allocation3], 0
    // Predicated region
    $region2: #{tpu_custom_call.1} parent=1 // pred_check
      _
    $region3: #{tpu_custom_call.1} parent=1 // pred_check_branch
      %14 = sbr.rel (0) target = $region5
    $region4: #{tpu_custom_call.1} parent=1 // pred_region
      _
    $region5: #{tpu_custom_call.1} parent=1 // pred_fallthru
      _
    // Predicated region
    $region6: #{tpu_custom_call.1} parent=1 // pred_check
      _
    $region7: #{tpu_custom_call.1} parent=1 // pred_check_branch
      %16 = sbr.rel (0) target = $region9
    $region8: #{tpu_custom_call.1} parent=1 // pred_region
      _
    $region9: #{tpu_custom_call.1} parent=1 // pred_fallthru
      _
    // Predicated region
    $region10: #{tpu_custom_call.1} parent=1 // pred_check
      _
    $region11: #{tpu_custom_call.1} parent=1 // pred_check_branch
      %18 = sbr.rel (0) target = $region13
    $region12: #{tpu_custom_call.1} parent=1 // pred_region
      _
    $region13: #{tpu_custom_call.1} parent=1 // pred_fallthru
      _
    // Predicated region
    $region14: #{tpu_custom_call.1} parent=1 // pred_check
      _
    $region15: #{tpu_custom_call.1} parent=1 // pred_check_branch
      %20 = sbr.rel (0) target = $region17
    $region16: #{tpu_custom_call.1} parent=1 // pred_region
      _
    $region17: #{tpu_custom_call.1} parent=1 // pred_fallthru
      _
    // Predicated region
    $region18: #{tpu_custom_call.1} parent=1 // pred_check
      _
    $region19: #{tpu_custom_call.1} parent=1 // pred_check_branch
      %22 = sbr.rel (0) target = $region21
    $region20: #{tpu_custom_call.1} parent=1 // pred_region
      _
    $region21: #{tpu_custom_call.1} parent=1 // pred_fallthru
      _
    // Predicated region
    $region22: #{tpu_custom_call.1} parent=1 // pred_check
      _
    $region23: #{tpu_custom_call.1} parent=1 // pred_check_branch
      %24 = sbr.rel (0) target = $region25
    $region24: #{tpu_custom_call.1} parent=1 // pred_region
      _
    $region25: #{tpu_custom_call.1} parent=1 // pred_fallthru
      _
    // Predicated region
    $region26: #{tpu_custom_call.1} parent=1 // pred_check
      _
    $region27: #{tpu_custom_call.1} parent=1 // pred_check_branch
      %26 = sbr.rel (0) target = $region29
    $region28: #{tpu_custom_call.1} parent=1 // pred_region
      _
    $region29: #{tpu_custom_call.1} parent=1 // pred_fallthru
      _
    %v27 = vld [vmem:[%s0] sm:$0xff]
    %v28 = vld [vmem:[%s2] sm:$0xff]
    %v29 = vld [vmem:[%s2 + $0x8] sm:$0xff]
    %v30 = vld [vmem:[%s1] sm:$0xff]
    %v31 = vld [vmem:[%s3] sm:$0xff]
    %vm32 = vcmask 64512
    %v34 = vsel %vm32, %v30, 0
    %36 = vmatprep.subr.mxu0 0.0
    %37 = vmatpush1.msra.mxu0 %v31
    %38 = vmatprep.subr.mxu0 0.0
    %39 = vmatpush1.msra.mxu0 0.0
    %40 = vmatprep.subr.mxu0 0.0
    %41 = vmatpush1.msra.mxu0 0.0
    %42 = vmatprep.subr.mxu0 0.0
    %43 = vmatpush1.msra.mxu0 0.0
    %44 = vmatprep.subr.mxu0 0.0
    %45 = vmatpush1.msra.mxu0 0.0
    %46 = vmatprep.subr.mxu0 0.0
    %47 = vmatpush1.msra.mxu0 0.0
    %48 = vmatprep.subr.mxu0 0.0
    %49 = vmatpush1.msra.mxu0 0.0
    %50 = vmatprep.subr.mxu0 0.0
    %51 = vmatpush1.msra.mxu0 0.0
    %52 = vmatprep.subr.mxu0 0.0
    %53 = vmatpush1.msra.mxu0 0.0
    %54 = vmatprep.subr.mxu0 0.0
    %55 = vmatpush1.msra.mxu0 0.0
    %56 = vmatprep.subr.mxu0 0.0
    %57 = vmatpush1.msra.mxu0 0.0
    %58 = vmatprep.subr.mxu0 0.0
    %59 = vmatpush1.msra.mxu0 0.0
    %60 = vmatprep.subr.mxu0 0.0
    %61 = vmatpush1.msra.mxu0 0.0
    %62 = vmatprep.subr.mxu0 0.0
    %63 = vmatpush1.msra.mxu0 0.0
    %64 = vmatprep.subr.mxu0 0.0
    %65 = vmatpush1.msra.mxu0 0.0
    %66 = vmatprep.subr.mxu0 0.0
    %67 = vmatpush1.msra.mxu0 0.0
    %68 = vmatprep.subr.mxu0 0.0
    %69 = vmatpush1.msra.mxu0 0.0
    %70 = vmatprep.subr.mxu0 0.0
    %71 = vmatpush1.msra.mxu0 0.0
    %72 = vmatprep.subr.mxu0 0.0
    %73 = vmatpush1.msra.mxu0 0.0
    %74 = vmatprep.subr.mxu0 0.0
    %75 = vmatpush1.msra.mxu0 0.0
    %76 = vmatprep.subr.mxu0 0.0
    %77 = vmatpush1.msra.mxu0 0.0
    %78 = vmatprep.subr.mxu0 0.0
    %79 = vmatpush1.msra.mxu0 0.0
    %80 = vmatprep.subr.mxu0 0.0
    %81 = vmatpush1.msra.mxu0 0.0
    %82 = vmatprep.subr.mxu0 0.0
    %83 = vmatpush1.msra.mxu0 0.0
    %84 = vmatprep.subr.mxu0 0.0
    %85 = vmatpush1.msra.mxu0 0.0
    %86 = vmatprep.subr.mxu0 0.0
    %87 = vmatpush1.msra.mxu0 0.0
    %88 = vmatprep.subr.mxu0 0.0
    %89 = vmatpush1.msra.mxu0 0.0
    %90 = vmatprep.subr.mxu0 0.0
    %91 = vmatpush1.msra.mxu0 0.0
    %92 = vmatprep.subr.mxu0 0.0
    %93 = vmatpush1.msra.mxu0 0.0
    %94 = vmatprep.subr.mxu0 0.0
    %95 = vmatpush1.msra.mxu0 0.0
    %96 = vmatprep.subr.mxu0 0.0
    %97 = vmatpush1.msra.mxu0 0.0
    %98 = vmatprep.subr.mxu0 0.0
    %99 = vmatpush1.msra.mxu0 0.0
    %100 = vmatprep.mubr.f32.mxu0 0.0
    %101 = vmatmul.mubr.f32.gmra.mrb[0].mxu0 %v34
    %v102 = vpop.f32.mrb[0].mxu0
    %v103 = vadd.f32 0.0, %v102
    %v104 = vpop.f32.mrb[0].mxu0
    %105 = vdwg.mxu0
    %vm106 = vcmask 130048
    %v108 = vsel %vm106, %v27, 0
    %110 = vmatprep.subr.mxu0 0.0
    %111 = vmatpush1.msra.mxu0 %v28
    %112 = vmatprep.subr.mxu0 0.0
    %113 = vmatpush1.msra.mxu0 %v29
    %114 = vmatprep.subr.mxu0 0.0
    %115 = vmatpush1.msra.mxu0 0.0
    %116 = vmatprep.subr.mxu0 0.0
    %117 = vmatpush1.msra.mxu0 0.0
    %118 = vmatprep.subr.mxu0 0.0
    %119 = vmatpush1.msra.mxu0 0.0
    %120 = vmatprep.subr.mxu0 0.0
    %121 = vmatpush1.msra.mxu0 0.0
    %122 = vmatprep.subr.mxu0 0.0
    %123 = vmatpush1.msra.mxu0 0.0
    %124 = vmatprep.subr.mxu0 0.0
    %125 = vmatpush1.msra.mxu0 0.0
    %126 = vmatprep.subr.mxu0 0.0
    %127 = vmatpush1.msra.mxu0 0.0
    %128 = vmatprep.subr.mxu0 0.0
    %129 = vmatpush1.msra.mxu0 0.0
    %130 = vmatprep.subr.mxu0 0.0
    %131 = vmatpush1.msra.mxu0 0.0
    %132 = vmatprep.subr.mxu0 0.0
    %133 = vmatpush1.msra.mxu0 0.0
    %134 = vmatprep.subr.mxu0 0.0
    %135 = vmatpush1.msra.mxu0 0.0
    %136 = vmatprep.subr.mxu0 0.0
    %137 = vmatpush1.msra.mxu0 0.0
    %138 = vmatprep.subr.mxu0 0.0
    %139 = vmatpush1.msra.mxu0 0.0
    %140 = vmatprep.subr.mxu0 0.0
    %141 = vmatpush1.msra.mxu0 0.0
    %142 = vmatprep.subr.mxu0 0.0
    %143 = vmatpush1.msra.mxu0 0.0
    %144 = vmatprep.subr.mxu0 0.0
    %145 = vmatpush1.msra.mxu0 0.0
    %146 = vmatprep.subr.mxu0 0.0
    %147 = vmatpush1.msra.mxu0 0.0
    %148 = vmatprep.subr.mxu0 0.0
    %149 = vmatpush1.msra.mxu0 0.0
    %150 = vmatprep.subr.mxu0 0.0
    %151 = vmatpush1.msra.mxu0 0.0
    %152 = vmatprep.subr.mxu0 0.0
    %153 = vmatpush1.msra.mxu0 0.0
    %154 = vmatprep.subr.mxu0 0.0
    %155 = vmatpush1.msra.mxu0 0.0
    %156 = vmatprep.subr.mxu0 0.0
    %157 = vmatpush1.msra.mxu0 0.0
    %158 = vmatprep.subr.mxu0 0.0
    %159 = vmatpush1.msra.mxu0 0.0
    %160 = vmatprep.subr.mxu0 0.0
    %161 = vmatpush1.msra.mxu0 0.0
    %162 = vmatprep.subr.mxu0 0.0
    %163 = vmatpush1.msra.mxu0 0.0
    %164 = vmatprep.subr.mxu0 0.0
    %165 = vmatpush1.msra.mxu0 0.0
    %166 = vmatprep.subr.mxu0 0.0
    %167 = vmatpush1.msra.mxu0 0.0
    %168 = vmatprep.subr.mxu0 0.0
    %169 = vmatpush1.msra.mxu0 0.0
    %170 = vmatprep.subr.mxu0 0.0
    %171 = vmatpush1.msra.mxu0 0.0
    %172 = vmatprep.subr.mxu0 0.0
    %173 = vmatpush1.msra.mxu0 0.0
    %174 = vmatprep.mubr.f32.mxu0 0.0
    %175 = vmatmul.mubr.f32.gmra.mrb[0].mxu0 %v108
    %v176 = vpop.f32.mrb[0].mxu0
    %v177 = vadd.f32 %v103, %v176
    %v178 = vpop.f32.mrb[0].mxu0
    %179 = vdwg.mxu0
    %v180 = vld [vmem:[%s4] sm:$0x1]
    %v182 = vlaneseq
    %v183 = vshrl.u32 %v182, 7
    %v184 = vsub.s32 0, %v183
    %v185 = vrot.slane %v180, %v184
    %v187 = vadd.f32 %v177, %v185
    %v188 = vmax.f32 %v187, 0.0
    %v189 = vld [vmem:[%s5] sm:$0xff]
    %v190 = vld [vmem:[%s5 + $0x8] sm:$0xff]
    %v191 = vld [vmem:[%s5 + $0x10] sm:$0xff]
    %v192 = vld [vmem:[%s5 + $0x18] sm:$0xff]
    %v193 = vld [vmem:[%s5 + $0x20] sm:$0xff]
    %v194 = vld [vmem:[%s5 + $0x28] sm:$0xff]
    %v195 = vld [vmem:[%s5 + $0x30] sm:$0xff]
    %v196 = vld [vmem:[%s5 + $0x38] sm:$0xff]
    %v197 = vld [vmem:[%s6] sm:$0x1]
    %v199 = vlaneseq
    %v200 = vshrl.u32 %v199, 7
    %v201 = vsub.s32 0, %v200
    %v202 = vrot.slane %v197, %v201
    %vm204 = vcmask 523264
    %v206 = vsel %vm204, %v188, 0
    %208 = vmatprep.subr.mxu0 0.0
    %209 = vmatpush1.msra.mxu0 %v189
    %210 = vmatprep.subr.mxu0 0.0
    %211 = vmatpush1.msra.mxu0 %v190
    %212 = vmatprep.subr.mxu0 0.0
    %213 = vmatpush1.msra.mxu0 %v191
    %214 = vmatprep.subr.mxu0 0.0
    %215 = vmatpush1.msra.mxu0 %v192
    %216 = vmatprep.subr.mxu0 0.0
    %217 = vmatpush1.msra.mxu0 %v193
    %218 = vmatprep.subr.mxu0 0.0
    %219 = vmatpush1.msra.mxu0 %v194
    %220 = vmatprep.subr.mxu0 0.0
    %221 = vmatpush1.msra.mxu0 %v195
    %222 = vmatprep.subr.mxu0 0.0
    %223 = vmatpush1.msra.mxu0 %v196
    %224 = vmatprep.subr.mxu0 0.0
    %225 = vmatpush1.msra.mxu0 0.0
    %226 = vmatprep.subr.mxu0 0.0
    %227 = vmatpush1.msra.mxu0 0.0
    %228 = vmatprep.subr.mxu0 0.0
    %229 = vmatpush1.msra.mxu0 0.0
    %230 = vmatprep.subr.mxu0 0.0
    %231 = vmatpush1.msra.mxu0 0.0
    %232 = vmatprep.subr.mxu0 0.0
    %233 = vmatpush1.msra.mxu0 0.0
    %234 = vmatprep.subr.mxu0 0.0
    %235 = vmatpush1.msra.mxu0 0.0
    %236 = vmatprep.subr.mxu0 0.0
    %237 = vmatpush1.msra.mxu0 0.0
    %238 = vmatprep.subr.mxu0 0.0
    %239 = vmatpush1.msra.mxu0 0.0
    %240 = vmatprep.subr.mxu0 0.0
    %241 = vmatpush1.msra.mxu0 0.0
    %242 = vmatprep.subr.mxu0 0.0
    %243 = vmatpush1.msra.mxu0 0.0
    %244 = vmatprep.subr.mxu0 0.0
    %245 = vmatpush1.msra.mxu0 0.0
    %246 = vmatprep.subr.mxu0 0.0
    %247 = vmatpush1.msra.mxu0 0.0
    %248 = vmatprep.subr.mxu0 0.0
    %249 = vmatpush1.msra.mxu0 0.0
    %250 = vmatprep.subr.mxu0 0.0
    %251 = vmatpush1.msra.mxu0 0.0
    %252 = vmatprep.subr.mxu0 0.0
    %253 = vmatpush1.msra.mxu0 0.0
    %254 = vmatprep.subr.mxu0 0.0
    %255 = vmatpush1.msra.mxu0 0.0
    %256 = vmatprep.subr.mxu0 0.0
    %257 = vmatpush1.msra.mxu0 0.0
    %258 = vmatprep.subr.mxu0 0.0
    %259 = vmatpush1.msra.mxu0 0.0
    %260 = vmatprep.subr.mxu0 0.0
    %261 = vmatpush1.msra.mxu0 0.0
    %262 = vmatprep.subr.mxu0 0.0
    %263 = vmatpush1.msra.mxu0 0.0
    %264 = vmatprep.subr.mxu0 0.0
    %265 = vmatpush1.msra.mxu0 0.0
    %266 = vmatprep.subr.mxu0 0.0
    %267 = vmatpush1.msra.mxu0 0.0
    %268 = vmatprep.subr.mxu0 0.0
    %269 = vmatpush1.msra.mxu0 0.0
    %270 = vmatprep.subr.mxu0 0.0
    %271 = vmatpush1.msra.mxu0 0.0
    %272 = vmatprep.mubr.f32.mxu0 0.0
    %273 = vmatmul.mubr.f32.gmra.mrb[0].mxu0 %v206
    %v274 = vpop.f32.mrb[0].mxu0
    %v275 = vadd.f32 %v202, %v274
    %v276 = vpop.f32.mrb[0].mxu0
    %277 = vdwg.mxu0
    %278 = vst.msk [vmem:[#allocation2] sm:$0xff] %vm106, %v275
    // Predicated region
    $region30: #{tpu_custom_call.1} parent=1 // pred_check
      _
    $region31: #{tpu_custom_call.1} parent=1 // pred_check_branch
      %280 = sbr.rel (0) target = $region33
    $region32: #{tpu_custom_call.1} parent=1 // pred_region
      %s282 = ssub.s32 128, 128
      %283 = vsyncadd [#allocation3], %s282
      %s285 = sshll.u32 [#allocation2], 4
      %s286 = int_to_ptr.vmem [resolvable:$true] %s285
      %288 = dma.vmem_to_hbm [thread:$0]  %s286, 128, %s7, [#allocation3]
    $region33: #{tpu_custom_call.1} parent=1 // pred_fallthru
      _
    // Predicated region
    $region34: #{tpu_custom_call.1} parent=1 // pred_check
      _
    $region35: #{tpu_custom_call.1} parent=1 // pred_check_branch
      %290 = sbr.rel (0) target = $region37
    $region36: #{tpu_custom_call.1} parent=1 // pred_region
      %291 = dma.done [#allocation3], 128
    $region37: #{tpu_custom_call.1} parent=1 // pred_fallthru
      _
    %292 = vsyncpa [#allocation3], 1

// kernel: tpu_custom_call.1
$region0: #{tpu_custom_call.1}
  #allocation0 [shape = 'u32[]', space=smem, size = 0x4, offset = 0x4, fixed_abs, tag = 'smem constant byte address 0x4 - core index']
  #allocation1 [shape = 'u32[144,128]{1,0:T(1,128)}', space=vmem, size = 0x12000, scoped, tag = 'internal scratch']
  %s0 = inlined_call_operand.vmem [shape: f32[8,16], index: 0, kind: input, shape index: {}]
  %s1 = inlined_call_operand.vmem [shape: f32[8,8], index: 1, kind: input, shape index: {}]
  %s2 = inlined_call_operand.vmem [shape: f32[16,64], index: 2, kind: input, shape index: {}]
  %s3 = inlined_call_operand.vmem [shape: f32[8,64], index: 3, kind: input, shape index: {}]
  %s4 = inlined_call_operand.vmem [shape: f32[1,64], index: 4, kind: input, shape index: {}]
  %s5 = inlined_call_operand.vmem [shape: f32[64,16], index: 5, kind: input, shape index: {}]
  %s6 = inlined_call_operand.vmem [shape: f32[1,16], index: 6, kind: input, shape index: {}]
  %s7 = inlined_call_operand.hbm [shape: f32[8,16], index: 7, kind: output, shape index: {}]
  %s8 = sld [smem:[#allocation0]]
  $region38: #{tpu_custom_call.1} parent=0
    _
  %s10 = ssub.s32 1, %s8
  %s11 = scalar_select 0, %s10, %s8
  $region1: #{tpu_custom_call.1} parent=0
    #allocation2 [shape = 'u8[4096]{0}', space=vmem, size = 0x1000, scoped, tag = 'output window, operand 0, single buffered']
    #allocation3 [shape = 's32[1]{0}', space=sflag, size = 0x4, scoped, tag = 'scoped memory for tpu_custom_call.1']
    %12 = vsyncpa [#allocation3], 0
    // Predicated region
    $region2: #{tpu_custom_call.1} parent=1 // pred_check
      _
    $region3: #{tpu_custom_call.1} parent=1 // pred_check_branch
      %14 = sbr.rel (0) target = $region5
    $region4: #{tpu_custom_call.1} parent=1 // pred_region
      _
    $region5: #{tpu_custom_call.1} parent=1 // pred_fallthru
      _
    // Predicated region
    $region6: #{tpu_custom_call.1} parent=1 // pred_check
      _
    $region7: #{tpu_custom_call.1} parent=1 // pred_check_branch
      %16 = sbr.rel (0) target = $region9
    $region8: #{tpu_custom_call.1} parent=1 // pred_region
      _
    $region9: #{tpu_custom_call.1} parent=1 // pred_fallthru
      _
    // Predicated region
    $region10: #{tpu_custom_call.1} parent=1 // pred_check
      _
    $region11: #{tpu_custom_call.1} parent=1 // pred_check_branch
      %18 = sbr.rel (0) target = $region13
    $region12: #{tpu_custom_call.1} parent=1 // pred_region
      _
    $region13: #{tpu_custom_call.1} parent=1 // pred_fallthru
      _
    // Predicated region
    $region14: #{tpu_custom_call.1} parent=1 // pred_check
      _
    $region15: #{tpu_custom_call.1} parent=1 // pred_check_branch
      %20 = sbr.rel (0) target = $region17
    $region16: #{tpu_custom_call.1} parent=1 // pred_region
      _
    $region17: #{tpu_custom_call.1} parent=1 // pred_fallthru
      _
    // Predicated region
    $region18: #{tpu_custom_call.1} parent=1 // pred_check
      _
    $region19: #{tpu_custom_call.1} parent=1 // pred_check_branch
      %22 = sbr.rel (0) target = $region21
    $region20: #{tpu_custom_call.1} parent=1 // pred_region
      _
    $region21: #{tpu_custom_call.1} parent=1 // pred_fallthru
      _
    // Predicated region
    $region22: #{tpu_custom_call.1} parent=1 // pred_check
      _
    $region23: #{tpu_custom_call.1} parent=1 // pred_check_branch
      %24 = sbr.rel (0) target = $region25
    $region24: #{tpu_custom_call.1} parent=1 // pred_region
      _
    $region25: #{tpu_custom_call.1} parent=1 // pred_fallthru
      _
    // Predicated region
    $region26: #{tpu_custom_call.1} parent=1 // pred_check
      _
    $region27: #{tpu_custom_call.1} parent=1 // pred_check_branch
      %26 = sbr.rel (0) target = $region29
    $region28: #{tpu_custom_call.1} parent=1 // pred_region
      _
    $region29: #{tpu_custom_call.1} parent=1 // pred_fallthru
      _
    %v27 = vld [vmem:[%s0] sm:$0xff]
    %v28 = vld [vmem:[%s2] sm:$0xff]
    %v29 = vld [vmem:[%s2 + $0x8] sm:$0xff]
    %v30 = vld [vmem:[%s1] sm:$0xff]
    %v31 = vld [vmem:[%s3] sm:$0xff]
    %vm32 = vcmask 64512
    %v34 = vsel %vm32, %v30, 0
    %36 = vmatprep.subr.mxu0 0.0
    %37 = vmatpush1.msra.mxu0 %v31
    %38 = vmatprep.subr.mxu0 0.0
    %39 = vmatpush1.msra.mxu0 0.0
    %40 = vmatprep.subr.mxu0 0.0
    %41 = vmatpush1.msra.mxu0 0.0
    %42 = vmatprep.subr.mxu0 0.0
    %43 = vmatpush1.msra.mxu0 0.0
    %44 = vmatprep.subr.mxu0 0.0
    %45 = vmatpush1.msra.mxu0 0.0
    %46 = vmatprep.subr.mxu0 0.0
    %47 = vmatpush1.msra.mxu0 0.0
    %48 = vmatprep.subr.mxu0 0.0
    %49 = vmatpush1.msra.mxu0 0.0
    %50 = vmatprep.subr.mxu0 0.0
    %51 = vmatpush1.msra.mxu0 0.0
    %52 = vmatprep.subr.mxu0 0.0
    %53 = vmatpush1.msra.mxu0 0.0
    %54 = vmatprep.subr.mxu0 0.0
    %55 = vmatpush1.msra.mxu0 0.0
    %56 = vmatprep.subr.mxu0 0.0
    %57 = vmatpush1.msra.mxu0 0.0
    %58 = vmatprep.subr.mxu0 0.0
    %59 = vmatpush1.msra.mxu0 0.0
    %60 = vmatprep.subr.mxu0 0.0
    %61 = vmatpush1.msra.mxu0 0.0
    %62 = vmatprep.subr.mxu0 0.0
    %63 = vmatpush1.msra.mxu0 0.0
    %64 = vmatprep.subr.mxu0 0.0
    %65 = vmatpush1.msra.mxu0 0.0
    %66 = vmatprep.subr.mxu0 0.0
    %67 = vmatpush1.msra.mxu0 0.0
    %68 = vmatprep.subr.mxu0 0.0
    %69 = vmatpush1.msra.mxu0 0.0
    %70 = vmatprep.subr.mxu0 0.0
    %71 = vmatpush1.msra.mxu0 0.0
    %72 = vmatprep.subr.mxu0 0.0
    %73 = vmatpush1.msra.mxu0 0.0
    %74 = vmatprep.subr.mxu0 0.0
    %75 = vmatpush1.msra.mxu0 0.0
    %76 = vmatprep.subr.mxu0 0.0
    %77 = vmatpush1.msra.mxu0 0.0
    %78 = vmatprep.subr.mxu0 0.0
    %79 = vmatpush1.msra.mxu0 0.0
    %80 = vmatprep.subr.mxu0 0.0
    %81 = vmatpush1.msra.mxu0 0.0
    %82 = vmatprep.subr.mxu0 0.0
    %83 = vmatpush1.msra.mxu0 0.0
    %84 = vmatprep.subr.mxu0 0.0
    %85 = vmatpush1.msra.mxu0 0.0
    %86 = vmatprep.subr.mxu0 0.0
    %87 = vmatpush1.msra.mxu0 0.0
    %88 = vmatprep.subr.mxu0 0.0
    %89 = vmatpush1.msra.mxu0 0.0
    %90 = vmatprep.subr.mxu0 0.0
    %91 = vmatpush1.msra.mxu0 0.0
    %92 = vmatprep.subr.mxu0 0.0
    %93 = vmatpush1.msra.mxu0 0.0
    %94 = vmatprep.subr.mxu0 0.0
    %95 = vmatpush1.msra.mxu0 0.0
    %96 = vmatprep.subr.mxu0 0.0
    %97 = vmatpush1.msra.mxu0 0.0
    %98 = vmatprep.subr.mxu0 0.0
    %99 = vmatpush1.msra.mxu0 0.0
    %100 = vmatprep.mubr.f32.mxu0 0.0
    %101 = vmatmul.mubr.f32.gmra.mrb[0].mxu0 %v34
    %v102 = vpop.f32.mrb[0].mxu0
    %v103 = vadd.f32 0.0, %v102
    %v104 = vpop.f32.mrb[0].mxu0
    %105 = vdwg.mxu0
    %vm106 = vcmask 130048
    %v108 = vsel %vm106, %v27, 0
    %110 = vmatprep.subr.mxu0 0.0
    %111 = vmatpush1.msra.mxu0 %v28
    %112 = vmatprep.subr.mxu0 0.0
    %113 = vmatpush1.msra.mxu0 %v29
    %114 = vmatprep.subr.mxu0 0.0
    %115 = vmatpush1.msra.mxu0 0.0
    %116 = vmatprep.subr.mxu0 0.0
    %117 = vmatpush1.msra.mxu0 0.0
    %118 = vmatprep.subr.mxu0 0.0
    %119 = vmatpush1.msra.mxu0 0.0
    %120 = vmatprep.subr.mxu0 0.0
    %121 = vmatpush1.msra.mxu0 0.0
    %122 = vmatprep.subr.mxu0 0.0
    %123 = vmatpush1.msra.mxu0 0.0
    %124 = vmatprep.subr.mxu0 0.0
    %125 = vmatpush1.msra.mxu0 0.0
    %126 = vmatprep.subr.mxu0 0.0
    %127 = vmatpush1.msra.mxu0 0.0
    %128 = vmatprep.subr.mxu0 0.0
    %129 = vmatpush1.msra.mxu0 0.0
    %130 = vmatprep.subr.mxu0 0.0
    %131 = vmatpush1.msra.mxu0 0.0
    %132 = vmatprep.subr.mxu0 0.0
    %133 = vmatpush1.msra.mxu0 0.0
    %134 = vmatprep.subr.mxu0 0.0
    %135 = vmatpush1.msra.mxu0 0.0
    %136 = vmatprep.subr.mxu0 0.0
    %137 = vmatpush1.msra.mxu0 0.0
    %138 = vmatprep.subr.mxu0 0.0
    %139 = vmatpush1.msra.mxu0 0.0
    %140 = vmatprep.subr.mxu0 0.0
    %141 = vmatpush1.msra.mxu0 0.0
    %142 = vmatprep.subr.mxu0 0.0
    %143 = vmatpush1.msra.mxu0 0.0
    %144 = vmatprep.subr.mxu0 0.0
    %145 = vmatpush1.msra.mxu0 0.0
    %146 = vmatprep.subr.mxu0 0.0
    %147 = vmatpush1.msra.mxu0 0.0
    %148 = vmatprep.subr.mxu0 0.0
    %149 = vmatpush1.msra.mxu0 0.0
    %150 = vmatprep.subr.mxu0 0.0
    %151 = vmatpush1.msra.mxu0 0.0
    %152 = vmatprep.subr.mxu0 0.0
    %153 = vmatpush1.msra.mxu0 0.0
    %154 = vmatprep.subr.mxu0 0.0
    %155 = vmatpush1.msra.mxu0 0.0
    %156 = vmatprep.subr.mxu0 0.0
    %157 = vmatpush1.msra.mxu0 0.0
    %158 = vmatprep.subr.mxu0 0.0
    %159 = vmatpush1.msra.mxu0 0.0
    %160 = vmatprep.subr.mxu0 0.0
    %161 = vmatpush1.msra.mxu0 0.0
    %162 = vmatprep.subr.mxu0 0.0
    %163 = vmatpush1.msra.mxu0 0.0
    %164 = vmatprep.subr.mxu0 0.0
    %165 = vmatpush1.msra.mxu0 0.0
    %166 = vmatprep.subr.mxu0 0.0
    %167 = vmatpush1.msra.mxu0 0.0
    %168 = vmatprep.subr.mxu0 0.0
    %169 = vmatpush1.msra.mxu0 0.0
    %170 = vmatprep.subr.mxu0 0.0
    %171 = vmatpush1.msra.mxu0 0.0
    %172 = vmatprep.subr.mxu0 0.0
    %173 = vmatpush1.msra.mxu0 0.0
    %174 = vmatprep.mubr.f32.mxu0 0.0
    %175 = vmatmul.mubr.f32.gmra.mrb[0].mxu0 %v108
    %v176 = vpop.f32.mrb[0].mxu0
    %v177 = vadd.f32 %v103, %v176
    %v178 = vpop.f32.mrb[0].mxu0
    %179 = vdwg.mxu0
    %v180 = vld [vmem:[%s4] sm:$0x1]
    %v182 = vlaneseq
    %v183 = vshrl.u32 %v182, 7
    %v184 = vsub.s32 0, %v183
    %v185 = vrot.slane %v180, %v184
    %v187 = vadd.f32 %v177, %v185
    %v188 = vmax.f32 %v187, 0.0
    %v189 = vld [vmem:[%s5] sm:$0xff]
    %v190 = vld [vmem:[%s5 + $0x8] sm:$0xff]
    %v191 = vld [vmem:[%s5 + $0x10] sm:$0xff]
    %v192 = vld [vmem:[%s5 + $0x18] sm:$0xff]
    %v193 = vld [vmem:[%s5 + $0x20] sm:$0xff]
    %v194 = vld [vmem:[%s5 + $0x28] sm:$0xff]
    %v195 = vld [vmem:[%s5 + $0x30] sm:$0xff]
    %v196 = vld [vmem:[%s5 + $0x38] sm:$0xff]
    %v197 = vld [vmem:[%s6] sm:$0x1]
    %v199 = vlaneseq
    %v200 = vshrl.u32 %v199, 7
    %v201 = vsub.s32 0, %v200
    %v202 = vrot.slane %v197, %v201
    %vm204 = vcmask 523264
    %v206 = vsel %vm204, %v188, 0
    %208 = vmatprep.subr.mxu0 0.0
    %209 = vmatpush1.msra.mxu0 %v189
    %210 = vmatprep.subr.mxu0 0.0
    %211 = vmatpush1.msra.mxu0 %v190
    %212 = vmatprep.subr.mxu0 0.0
    %213 = vmatpush1.msra.mxu0 %v191
    %214 = vmatprep.subr.mxu0 0.0
    %215 = vmatpush1.msra.mxu0 %v192
    %216 = vmatprep.subr.mxu0 0.0
    %217 = vmatpush1.msra.mxu0 %v193
    %218 = vmatprep.subr.mxu0 0.0
    %219 = vmatpush1.msra.mxu0 %v194
    %220 = vmatprep.subr.mxu0 0.0
    %221 = vmatpush1.msra.mxu0 %v195
    %222 = vmatprep.subr.mxu0 0.0
    %223 = vmatpush1.msra.mxu0 %v196
    %224 = vmatprep.subr.mxu0 0.0
    %225 = vmatpush1.msra.mxu0 0.0
    %226 = vmatprep.subr.mxu0 0.0
    %227 = vmatpush1.msra.mxu0 0.0
    %228 = vmatprep.subr.mxu0 0.0
    %229 = vmatpush1.msra.mxu0 0.0
    %230 = vmatprep.subr.mxu0 0.0
    %231 = vmatpush1.msra.mxu0 0.0
    %232 = vmatprep.subr.mxu0 0.0
    %233 = vmatpush1.msra.mxu0 0.0
    %234 = vmatprep.subr.mxu0 0.0
    %235 = vmatpush1.msra.mxu0 0.0
    %236 = vmatprep.subr.mxu0 0.0
    %237 = vmatpush1.msra.mxu0 0.0
    %238 = vmatprep.subr.mxu0 0.0
    %239 = vmatpush1.msra.mxu0 0.0
    %240 = vmatprep.subr.mxu0 0.0
    %241 = vmatpush1.msra.mxu0 0.0
    %242 = vmatprep.subr.mxu0 0.0
    %243 = vmatpush1.msra.mxu0 0.0
    %244 = vmatprep.subr.mxu0 0.0
    %245 = vmatpush1.msra.mxu0 0.0
    %246 = vmatprep.subr.mxu0 0.0
    %247 = vmatpush1.msra.mxu0 0.0
    %248 = vmatprep.subr.mxu0 0.0
    %249 = vmatpush1.msra.mxu0 0.0
    %250 = vmatprep.subr.mxu0 0.0
    %251 = vmatpush1.msra.mxu0 0.0
    %252 = vmatprep.subr.mxu0 0.0
    %253 = vmatpush1.msra.mxu0 0.0
    %254 = vmatprep.subr.mxu0 0.0
    %255 = vmatpush1.msra.mxu0 0.0
    %256 = vmatprep.subr.mxu0 0.0
    %257 = vmatpush1.msra.mxu0 0.0
    %258 = vmatprep.subr.mxu0 0.0
    %259 = vmatpush1.msra.mxu0 0.0
    %260 = vmatprep.subr.mxu0 0.0
    %261 = vmatpush1.msra.mxu0 0.0
    %262 = vmatprep.subr.mxu0 0.0
    %263 = vmatpush1.msra.mxu0 0.0
    %264 = vmatprep.subr.mxu0 0.0
    %265 = vmatpush1.msra.mxu0 0.0
    %266 = vmatprep.subr.mxu0 0.0
    %267 = vmatpush1.msra.mxu0 0.0
    %268 = vmatprep.subr.mxu0 0.0
    %269 = vmatpush1.msra.mxu0 0.0
    %270 = vmatprep.subr.mxu0 0.0
    %271 = vmatpush1.msra.mxu0 0.0
    %272 = vmatprep.mubr.f32.mxu0 0.0
    %273 = vmatmul.mubr.f32.gmra.mrb[0].mxu0 %v206
    %v274 = vpop.f32.mrb[0].mxu0
    %v275 = vadd.f32 %v202, %v274
    %v276 = vpop.f32.mrb[0].mxu0
    %277 = vdwg.mxu0
    %278 = vst.msk [vmem:[#allocation2] sm:$0xff] %vm106, %v275
    // Predicated region
    $region30: #{tpu_custom_call.1} parent=1 // pred_check
      _
    $region31: #{tpu_custom_call.1} parent=1 // pred_check_branch
      %280 = sbr.rel (0) target = $region33
    $region32: #{tpu_custom_call.1} parent=1 // pred_region
      %s282 = ssub.s32 128, 128
      %283 = vsyncadd [#allocation3], %s282
      %s285 = sshll.u32 [#allocation2], 4
      %s286 = int_to_ptr.vmem [resolvable:$true] %s285
      %288 = dma.vmem_to_hbm [thread:$0]  %s286, 128, %s7, [#allocation3]
    $region33: #{tpu_custom_call.1} parent=1 // pred_fallthru
      _
    // Predicated region
    $region34: #{tpu_custom_call.1} parent=1 // pred_check
      _
    $region35: #{tpu_custom_call.1} parent=1 // pred_check_branch
      %290 = sbr.rel (0) target = $region37
    $region36: #{tpu_custom_call.1} parent=1 // pred_region
      %291 = dma.done [#allocation3], 128
    $region37: #{tpu_custom_call.1} parent=1 // pred_fallthru
      _
    %292 = vsyncpa [#allocation3], 1

</llo_original>
